<compile_context>
chip_gen: v7x
topology: tpu7x:2x2x1
jax: 0.10.0
libtpu: 0.0.40
codegen_flags: <defaults>
</compile_context>

<pallas_src>
import functools

import jax
import jax.numpy as jnp
from jax import lax
from jax.experimental import pallas as pl
from jax.experimental.pallas import tpu as pltpu


def _round_up(x, m):
    return (x + m - 1) // m * m


# ---------------------------------------------------------------------------
# Kernel 1: fused packed Q/K/V projection (scale pre-folded into the Q columns).
# ---------------------------------------------------------------------------
def _proj_kernel(x_ref, w_ref, qkv_ref):
    qkv_ref[0] = jnp.dot(x_ref[0], w_ref[...],
                         preferred_element_type=jnp.float32).astype(qkv_ref.dtype)


# ---------------------------------------------------------------------------
# Kernel 2: flash attention over a compacted lower-triangular (qi, ki) schedule.
# ---------------------------------------------------------------------------
def _flash_attn_kernel(q_ids_ref, k_ids_ref, q_ref, k_ref, v_ref, o_ref,
                       m_sc, l_sc, acc_sc, *, tq, tk, kv_resident, exp_dtype,
                       recip_approx):
    s_idx = pl.program_id(1)
    qi = q_ids_ref[s_idx]          # query-tile index of this step
    ki = k_ids_ref[s_idx]          # kv-tile index of this step (<= diagonal)

    @pl.when(ki == 0)              # first kv step for this query tile
    def _init():
        m_sc[...] = jnp.full_like(m_sc, -jnp.inf)
        l_sc[...] = jnp.zeros_like(l_sc)
        acc_sc[...] = jnp.zeros_like(acc_sc)

    q = q_ref[0]                                               # (tq, Dp)
    if kv_resident:
        # Whole-K/V-in-VMEM path: slice the resident block (no per-step HBM DMA).
        off = pl.multiple_of(ki * tk, tk)
        k = k_ref[0, pl.ds(off, tk), :]                        # (tk, Dp)
        v = v_ref[0, pl.ds(off, tk), :]
    else:
        k = k_ref[0]                                           # (tk, Dp)
        v = v_ref[0]

    # Contract the feature axis of both operands (no explicit k.T relayout).
    s = lax.dot_general(q, k, dimension_numbers=(((1,), (1,)), ((), ())),
                        preferred_element_type=jnp.float32)    # (tq, tk) f32

    # The kv tile straddles the causal diagonal iff its max col exceeds min row.
    needs_mask = (ki * tk + (tk - 1)) > (qi * tq)

    def _update(scores):
        m_prev = m_sc[...]
        m_new = jnp.maximum(m_prev, jnp.max(scores, axis=-1, keepdims=True))
        alpha = jnp.exp(m_prev - m_new)
        p = jnp.exp((scores - m_new).astype(exp_dtype))
        l_sc[...] = alpha * l_sc[...] + jnp.sum(p.astype(jnp.float32),
                                                axis=-1, keepdims=True)
        acc_sc[...] = alpha * acc_sc[...] + jnp.dot(
            p.astype(v.dtype), v, preferred_element_type=jnp.float32)
        m_sc[...] = m_new

    @pl.when(needs_mask)           # diagonal-straddling tile: global-index mask
    def _masked():
        row = qi * tq + lax.broadcasted_iota(jnp.int32, (tq, tk), 0)
        col = ki * tk + lax.broadcasted_iota(jnp.int32, (tq, tk), 1)
        _update(jnp.where(col <= row, s, -jnp.inf))

    @pl.when(jnp.logical_not(needs_mask))   # fully visible tile: no mask work
    def _unmasked():
        _update(s)

    @pl.when(ki == (qi * tq + tq - 1) // tk)   # last kv tile for this query tile
    def _finalize():
        # TODO(synk): nn.Dropout on attention weights (training mode) is omitted;
        # this matches eval-mode (identity) behaviour.
        o_ref[0] = (acc_sc[...] * pl.reciprocal(l_sc[...], approx=recip_approx)
                    ).astype(o_ref.dtype)


# ---------------------------------------------------------------------------
# Wrapper
# ---------------------------------------------------------------------------
def single_head_attention(x, w_q, w_k, w_v, *, tile_q=128, tile_k=256,
                          qkv_dtype=jnp.bfloat16, exp_dtype=jnp.float32,
                          kv_resident=None):
    """Causal single-head attention.

    x:   (B, S, d_model);  w_*: (d_model, d_head)  ->  (B, S, d_head) in x.dtype.
    qkv_dtype:  MXU operand dtype for Q/K/V (bf16 default, 2-4x MXU throughput);
                softmax stats stay f32.
    exp_dtype:  dtype fed to jnp.exp (pass jnp.bfloat16 on v6e/v7x to relieve the
                single EUP slot; keep f32 on v5e).
    tile_q/tile_k: query/kv tile sizes (128/256 fills the 256-wide MXU on v6e/v7x;
                   still fine on v5e).
    kv_resident: force/disable whole-sequence K/V residency in VMEM (None = auto).
    """
    B, S, d_model = x.shape
    d_head = w_q.shape[1]
    out_dtype = x.dtype
    scale = float(d_head) ** -0.5

    assert max(tile_q, tile_k) % min(tile_q, tile_k) == 0

    # Tile / padding geometry.
    if _round_up(S, 8) <= min(tile_q, tile_k):
        tq = tk = _round_up(S, 8)              # single-tile case
    else:
        tq, tk = tile_q, tile_k
    S_p = _round_up(S, max(tq, tk))
    Dp = _round_up(d_head, 128)                # lane-dense head dim
    n_q = S_p // tq
    tp = max(tq, tk)                           # projection row tile (divides S_p)

    itemsize = jnp.dtype(qkv_dtype).itemsize
    if kv_resident is None:                    # auto: double-buffered K+V budget
        kv_resident = 2 * 2 * S_p * Dp * itemsize <= (20 << 20)

    # Pad sequence with zero rows (causally invisible to all valid queries).
    x_p = x.astype(qkv_dtype)
    if S_p != S:
        x_p = jnp.pad(x_p, ((0, 0), (0, S_p - S), (0, 0)))

    # Pack Wq|Wk|Wv into one (d_model, 3*Dp) weight; fold 1/sqrt(d_head) into Wq.
    # (If weights are static, hoist this packing out of the per-call path.)
    def _pad_cols(w):
        return jnp.pad(w, ((0, 0), (0, Dp - d_head))) if Dp != d_head else w

    w_packed = jnp.concatenate(
        [_pad_cols(w_q * scale), _pad_cols(w_k), _pad_cols(w_v)],
        axis=1).astype(qkv_dtype)

    # --- Kernel 1: fused packed Q/K/V projection ------------------------------
    qkv = pl.pallas_call(
        _proj_kernel,
        out_shape=jax.ShapeDtypeStruct((B, S_p, 3 * Dp), qkv_dtype),
        grid_spec=pltpu.PrefetchScalarGridSpec(
            num_scalar_prefetch=0,
            grid=(B, S_p // tp),
            in_specs=[
                pl.BlockSpec((1, tp, d_model), lambda b, s: (b, s, 0)),
                pl.BlockSpec((d_model, 3 * Dp), lambda b, s: (0, 0)),
            ],
            out_specs=pl.BlockSpec((1, tp, 3 * Dp), lambda b, s: (b, s, 0)),
        ),
        compiler_params=pltpu.CompilerParams(
            dimension_semantics=("parallel", "parallel")),
    )(x_p, w_packed)

    # --- Lower-triangular (qi, ki) schedule (scalar-prefetched to SMEM) -------
    q_ids, k_ids = [], []
    for qi in range(n_q):
        last_ki = (qi * tq + tq - 1) // tk
        for ki in range(last_ki + 1):
            q_ids.append(qi)
            k_ids.append(ki)
    n_steps = len(q_ids)
    q_ids = jnp.asarray(q_ids, dtype=jnp.int32)
    k_ids = jnp.asarray(k_ids, dtype=jnp.int32)

    if kv_resident:
        kv_block = (1, S_p, Dp)                          # whole K / V per batch
        k_map = lambda b, s, qid, kid: (b, 0, 1)
        v_map = lambda b, s, qid, kid: (b, 0, 2)
    else:
        kv_block = (1, tk, Dp)                           # streamed per kv tile
        k_map = lambda b, s, qid, kid: (b, kid[s], 1)
        v_map = lambda b, s, qid, kid: (b, kid[s], 2)

    kernel = functools.partial(
        _flash_attn_kernel, tq=tq, tk=tk, kv_resident=kv_resident,
        exp_dtype=exp_dtype, recip_approx=(out_dtype != jnp.float32))

    # Explicit VMEM budget (leave headroom under v7x's 64 MiB physical cap).
    kv_buf = 2 * 2 * (S_p if kv_resident else tk) * Dp * itemsize
    est = (kv_buf + 2 * tq * Dp * itemsize
           + 2 * tq * Dp * jnp.dtype(out_dtype).itemsize
           + tq * (Dp + 2) * 4)
    vmem_limit = int(min(max(2 * est, 32 << 20), 48 << 20))

    # --- Kernel 2: flash attention on the compacted schedule ------------------
    # Note (v7x megacore): only B and the step axis exist; B is the parallel axis,
    # so B >= 2 keeps both TensorCores busy.
    o = pl.pallas_call(
        kernel,
        out_shape=jax.ShapeDtypeStruct((B, S_p, Dp), out_dtype),
        grid_spec=pltpu.PrefetchScalarGridSpec(
            num_scalar_prefetch=2,
            grid=(B, n_steps),
            in_specs=[
                pl.BlockSpec((1, tq, Dp), lambda b, s, qid, kid: (b, qid[s], 0)),
                pl.BlockSpec(kv_block, k_map),
                pl.BlockSpec(kv_block, v_map),
            ],
            out_specs=pl.BlockSpec((1, tq, Dp),
                                   lambda b, s, qid, kid: (b, qid[s], 0)),
            scratch_shapes=[
                pltpu.VMEM((tq, 1), jnp.float32),    # running max m
                pltpu.VMEM((tq, 1), jnp.float32),    # running denominator l
                pltpu.VMEM((tq, Dp), jnp.float32),   # running numerator acc
            ],
        ),
        compiler_params=pltpu.CompilerParams(
            dimension_semantics=("parallel", "arbitrary"),
            vmem_limit_bytes=vmem_limit),
    )(q_ids, k_ids, qkv, qkv, qkv)

    if S_p != S or Dp != d_head:
        o = o[:, :S, :d_head]
    return o


# ---------------------------------------------------------------------------
# Pure-JAX reference (mirrors the PyTorch forward, eval mode)
# ---------------------------------------------------------------------------
def reference_attention(x, w_q, w_k, w_v):
    d_head = w_q.shape[1]
    S = x.shape[1]
    q = x @ w_q
    k = x @ w_k
    v = x @ w_v
    scores = (q @ jnp.swapaxes(k, -2, -1)) * (d_head ** -0.5)
    mask = jnp.tril(jnp.ones((S, S), dtype=bool))
    scores = jnp.where(mask, scores, -jnp.inf)
    w = jax.nn.softmax(scores, axis=-1)
    return w @ v


if __name__ == "__main__":
    B, S, d_model, d_head = 2, 8, 32, 16

    key = jax.random.PRNGKey(0)
    kx, kq, kk, kv = jax.random.split(key, 4)
    x = jax.random.normal(kx, (B, S, d_model), dtype=jnp.float32)
    w_q = jax.random.normal(kq, (d_model, d_head), dtype=jnp.float32) * (d_model ** -0.5)
    w_k = jax.random.normal(kk, (d_model, d_head), dtype=jnp.float32) * (d_model ** -0.5)
    w_v = jax.random.normal(kv, (d_model, d_head), dtype=jnp.float32) * (d_model ** -0.5)

    ref = reference_attention(x, w_q, w_k, w_v)

    # Default path: bf16 MXU operands, f32 softmax stats (single tile, masked).
    out = jax.block_until_ready(single_head_attention(x, w_q, w_k, w_v))
    assert out.shape == (B, S, d_head)
    assert jnp.allclose(out, ref, atol=1e-1, rtol=1e-1), "bf16 mismatch vs reference"

    # Strict f32 path.
    out_f32 = jax.block_until_ready(
        single_head_attention(x, w_q, w_k, w_v, qkv_dtype=jnp.float32))
    assert jnp.allclose(out_f32, ref, atol=2e-2, rtol=2e-2), "f32 mismatch vs reference"

    # Multi-tile path: tq=128 != tk=256, compacted triangular schedule, global
    # causal mask, sequence padding, resident-KV dynamic slicing.
    S2 = 300
    x2 = jax.random.normal(jax.random.PRNGKey(1), (B, S2, d_model), dtype=jnp.float32)
    ref2 = reference_attention(x2, w_q, w_k, w_v)
    out2 = jax.block_until_ready(
        single_head_attention(x2, w_q, w_k, w_v, qkv_dtype=jnp.float32))
    assert out2.shape == (B, S2, d_head)
    assert jnp.allclose(out2, ref2, atol=2e-2, rtol=2e-2), "multi-tile f32 mismatch"

    # Streaming-KV path (forced) with default bf16 operands.
    out3 = jax.block_until_ready(
        single_head_attention(x2, w_q, w_k, w_v, kv_resident=False))
    assert jnp.allclose(out3, ref2, atol=1e-1, rtol=1e-1), "streaming-KV mismatch"

    print("KERNEL_OK")
</pallas_src>

<mosaic_0001>
module attributes {stable_mosaic.version = 11 : i64} {
  func.func @_proj_kernel(%arg0: i32, %arg1: i32, %arg2: memref<1x8x32xbf16, #tpu.memory_space<vmem>>, %arg3: memref<32x384xbf16, #tpu.memory_space<vmem>>, %arg4: memref<1x8x384xbf16, #tpu.memory_space<vmem>>) attributes {dimension_semantics = [#tpu.dimension_semantics<parallel>, #tpu.dimension_semantics<parallel>], iteration_bounds = array<i64: 2, 1>, scalar_prefetch = 0 : i64, scratch_operands = 0 : i64, tpu.core_type = #tpu.core_type<tc>, window_params = [{transform_indices = @transform_0, window_bounds = array<i64: 1, 8, 32>}, {pipeline_mode = #tpu.pipeline_mode<synchronous>, transform_indices = @transform_1, window_bounds = array<i64: 32, 384>}, {transform_indices = @transform_2, window_bounds = array<i64: 1, 8, 384>}]} {
    %c0 = arith.constant 0 : index
    %c0_0 = arith.constant 0 : index
    %c0_1 = arith.constant 0 : index
    %0 = vector.load %arg2[%c0, %c0_0, %c0_1] : memref<1x8x32xbf16, #tpu.memory_space<vmem>>, vector<1x8x32xbf16>
    %1 = vector.shape_cast %0 : vector<1x8x32xbf16> to vector<8x32xbf16>
    %c0_2 = arith.constant 0 : index
    %c0_3 = arith.constant 0 : index
    %2 = vector.load %arg3[%c0_2, %c0_3] : memref<32x384xbf16, #tpu.memory_space<vmem>>, vector<32x384xbf16>
    %cst = arith.constant dense<0.000000e+00> : vector<8x384xf32>
    %3 = tpu.matmul %1, %2, %cst {dimension_numbers = #tpu.dot_dimension_numbers<[1], [0], [0], [1], [0, 0, 1, 1], [], []>} : vector<8x32xbf16>, vector<32x384xbf16>, vector<8x384xf32> -> vector<8x384xf32>
    %4 = arith.truncf %3 : vector<8x384xf32> to vector<8x384xbf16>
    %c0_4 = arith.constant 0 : index
    %c0_5 = arith.constant 0 : index
    %c0_6 = arith.constant 0 : index
    %5 = vector.load %arg4[%c0_4, %c0_5, %c0_6] : memref<1x8x384xbf16, #tpu.memory_space<vmem>>, vector<1x8x384xbf16>
    %6 = vector.shape_cast %5 : vector<1x8x384xbf16> to vector<8x384xbf16>
    %7 = vector.shape_cast %4 : vector<8x384xbf16> to vector<1x8x384xbf16>
    tpu.vector_store %arg4[%c0_4, %c0_5, %c0_6], %7 {strides = array<i32>} : memref<1x8x384xbf16, #tpu.memory_space<vmem>>, vector<1x8x384xbf16>,
    return
  }
  func.func @transform_0(%arg0: i32, %arg1: i32) -> (i32, i32, i32) {
    %c0_i32 = arith.constant 0 : i32
    %c0_i32_0 = arith.constant 0 : i32
    return %arg0, %arg1, %c0_i32 : i32, i32, i32
  }
  func.func @transform_1(%arg0: i32, %arg1: i32) -> (i32, i32) {
    %c0_i32 = arith.constant 0 : i32
    %c0_i32_0 = arith.constant 0 : i32
    %c0_i32_1 = arith.constant 0 : i32
    return %c0_i32, %c0_i32_0 : i32, i32
  }
  func.func @transform_2(%arg0: i32, %arg1: i32) -> (i32, i32, i32) {
    %c0_i32 = arith.constant 0 : i32
    %c0_i32_0 = arith.constant 0 : i32
    return %arg0, %arg1, %c0_i32 : i32, i32, i32
  }
}

</mosaic_0001>

<llo_original>
// kernel: tpu_custom_call.1
$region0: #{tpu_custom_call.1}
  #allocation0 [shape = 'u32[]', space=smem, size = 0x4, offset = 0x4, fixed_abs, tag = 'smem constant byte address 0x4 - core index']
  #allocation1 [shape = 'u32[144,128]{1,0:T(1,128)}', space=vmem, size = 0x12000, scoped, tag = 'internal scratch']
  %s0 = inlined_call_operand.hbm [shape: bf16[2,8,32], index: 0, kind: input, shape index: {}]
  %s1 = inlined_call_operand.hbm [shape: bf16[32,384], index: 1, kind: input, shape index: {}]
  %s2 = inlined_call_operand.hbm [shape: bf16[2,8,384], index: 2, kind: output, shape index: {}]
  %s3 = sld [smem:[#allocation0]]
  $region49: #{tpu_custom_call.1} parent=0
    _
  %s5 = ssub.s32 1, %s3
  %s6 = scalar_select 0, %s5, %s3
  $region1: #{tpu_custom_call.1} parent=0
    #allocation2 [shape = 'u8[4096]{0}', space=vmem, size = 0x1000, scoped, tag = 'input window, operand 0']
    #allocation3 [shape = 's32[2]{0}', space=sflag, size = 0x8, scoped, tag = 'scoped memory for tpu_custom_call.1']
    #allocation4 [shape = 's32[2]{0}', space=sflag, size = 0x8, scoped, tag = 'scoped memory for tpu_custom_call.1']
    #allocation5 [shape = 'u8[24576]{0}', space=vmem, size = 0x6000, scoped, tag = 'input window, operand 1, single buffered']
    #allocation6 [shape = 's32[1]{0}', space=sflag, size = 0x4, scoped, tag = 'scoped memory for tpu_custom_call.1']
    #allocation7 [shape = 'u8[12288]{0}', space=vmem, size = 0x3000, scoped, tag = 'output window, operand 0']
    %7 = vsyncpa [#allocation3], 0
    %s8 = scalar_lea.sflag [#allocation3], 1
    %9 = vsyncpa %s8, 0
    %10 = vsyncpa [#allocation6], 0
    %11 = vsyncpa [#allocation4], 0
    %s12 = scalar_lea.sflag [#allocation4], 1
    %13 = vsyncpa %s12, 0
    loop: start=0, step=1, limit=4
    $region2: #{tpu_custom_call.1} parent=1 // loop_pre_header
      _
    $region3: #{tpu_custom_call.1} parent=1 // loop_header
      %s15 = sphi 0, %s19
      %p16 = scmp.ge.s32.totalorder %s15, 4
      %s22 = sphi 0, %s34
      %s23 = sphi 0, %s30
      %s24 = sphi 0, %s22
      %s25 = sphi 0, %s23
      %s26 = sphi 0, %s24
      %s27 = sphi 0, %s25
      %s39 = sphi 0, %s41
      %s42 = sphi 0, %s39
      %s43 = sphi 0, %s42
      %s59 = sphi 0, %s43
      %s63 = sphi 0, %s63
      %s65 = sphi 0, %s63
      %s66 = sphi 0, %s65
      %s80 = sphi 0, %s66
      %s88 = sphi 0, %s90
      %s91 = sphi 0, %s88
      %s92 = sphi 0, %s91
      %s108 = sphi 0, %s92
    $region4: #{tpu_custom_call.1} parent=1 // loop_header_branch
      %18 = sbr.rel (%p16) target = $region8
    $region5: #{tpu_custom_call.1} parent=1 // loop_body
      %s20 = ssub.s32 %s15, 1
      %s21 = ssub.s32 %s15, 2
      %s28 = sadd.s32 1, %s23
      %p29 = scmp.ge.s32.totalorder %s28, 1
      %s30 = scalar_select %p29, 0, %s28
      %s31 = sadd.s32 1, %s22
      %s32 = scalar_select %p29, %s31, %s22
      %p33 = scmp.ge.s32.totalorder %s32, 2
      %s34 = scalar_select %p33, 0, %s32
      %s35 = ssub.s32 %s22, %s34
      %s36 = ssub.s32 %s23, %s30
      %s37 = sor.u32 %s35, %s36
      %p38 = scmp.eq.s32.totalorder %s37, 0
      %s40 = sadd.s32 %s39, 1
      %s41 = scalar_select %p38, %s39, %s40
      %p44 = pneg %p38
      %p45 = scmp.eq.s32.totalorder %s15, 1
      %p46 = por %p44, %p45
      %p47 = scmp.ne.s32.totalorder %s39, %s42
      %p48 = scmp.eq.s32.totalorder %s15, 0
      %p49 = por %p47, %p48
      %p50 = scmp.ne.s32.totalorder %s39, %s42
      %p51 = scmp.eq.s32.totalorder %s20, 1
      %p52 = por %p50, %p51
      %p53 = scmp.ne.s32.totalorder %s42, %s43
      %p54 = scmp.eq.s32.totalorder %s20, 0
      %p55 = por %p53, %p54
      %p56 = scmp.ne.s32.totalorder %s42, %s43
      %p57 = scmp.eq.s32.totalorder %s21, 1
      %p58 = por %p56, %p57
      %p60 = scmp.ne.s32.totalorder %s43, %s59
      %p61 = scmp.eq.s32.totalorder %s21, 0
      %p62 = por %p60, %p61
      %s64 = sadd.s32 %s63, 1
      %p67 = scmp.eq.s32.totalorder %s15, 1
      %p68 = scmp.ne.s32.totalorder %s63, %s65
      %p69 = scmp.eq.s32.totalorder %s15, 0
      %p70 = por %p68, %p69
      %p71 = scmp.ne.s32.totalorder %s63, %s65
      %p72 = scmp.eq.s32.totalorder %s20, 1
      %p73 = por %p71, %p72
      %p74 = scmp.ne.s32.totalorder %s65, %s66
      %p75 = scmp.eq.s32.totalorder %s20, 0
      %p76 = por %p74, %p75
      %p77 = scmp.ne.s32.totalorder %s65, %s66
      %p78 = scmp.eq.s32.totalorder %s21, 1
      %p79 = por %p77, %p78
      %p81 = scmp.ne.s32.totalorder %s66, %s80
      %p82 = scmp.eq.s32.totalorder %s21, 0
      %p83 = por %p81, %p82
      %s84 = ssub.s32 %s22, %s34
      %s85 = ssub.s32 %s23, %s30
      %s86 = sor.u32 %s84, %s85
      %p87 = scmp.eq.s32.totalorder %s86, 0
      %s89 = sadd.s32 %s88, 1
      %s90 = scalar_select %p87, %s88, %s89
      %p93 = pneg %p87
      %p94 = scmp.eq.s32.totalorder %s15, 1
      %p95 = por %p93, %p94
      %p96 = scmp.ne.s32.totalorder %s88, %s91
      %p97 = scmp.eq.s32.totalorder %s15, 0
      %p98 = por %p96, %p97
      %p99 = scmp.ne.s32.totalorder %s88, %s91
      %p100 = scmp.eq.s32.totalorder %s20, 1
      %p101 = por %p99, %p100
      %p102 = scmp.ne.s32.totalorder %s91, %s92
      %p103 = scmp.eq.s32.totalorder %s20, 0
      %p104 = por %p102, %p103
      %p105 = scmp.ne.s32.totalorder %s91, %s92
      %p106 = scmp.eq.s32.totalorder %s21, 1
      %p107 = por %p105, %p106
      %p109 = scmp.ne.s32.totalorder %s92, %s108
      %p110 = scmp.eq.s32.totalorder %s21, 0
      %p111 = por %p109, %p110
      %p112 = scmp.le.s32.totalorder 1, %s15
      %p113 = scmp.lt.s32.totalorder %s15, 3
      %p114 = pnand %p112, %p113
      %p115 = pneg %p114
      // Predicated region
      $region9: #{tpu_custom_call.1} parent=5 // pred_check
        _
      $region10: #{tpu_custom_call.1} parent=5 // pred_check_branch
        %117 = sbr.rel (%p114) target = $region12
      $region11: #{tpu_custom_call.1} parent=5 // pred_region
        %s118 = ssub.s32 %s15, 1
        // Predicated region
        $region13: #{tpu_custom_call.1} parent=11 // pred_check
          %p119 = pneg %p76
        $region14: #{tpu_custom_call.1} parent=11 // pred_check_branch
          %121 = sbr.rel (%p119) target = $region16
        $region15: #{tpu_custom_call.1} parent=11 // pred_region
          %s123 = ssub.s32 768, 768
          %124 = vsyncadd [#allocation6], %s123
          %s125 = sshll.u32 [#allocation5], 4
          %s126 = int_to_ptr.vmem [resolvable:$true] %s125
          %131 = dma.hbm_to_vmem [thread:$0]  %s1, 768, %s126, [#allocation6], 192, 192, 12
        $region16: #{tpu_custom_call.1} parent=11 // pred_fallthru
          _
      $region12: #{tpu_custom_call.1} parent=5 // pred_fallthru
        _
      %p132 = scmp.lt.s32.totalorder %s15, 2
      // Predicated region
      $region17: #{tpu_custom_call.1} parent=5 // pred_check
        %p133 = pneg %p132
      $region18: #{tpu_custom_call.1} parent=5 // pred_check_branch
        %135 = sbr.rel (%p133) target = $region20
      $region19: #{tpu_custom_call.1} parent=5 // pred_region
        // Predicated region
        $region21: #{tpu_custom_call.1} parent=19 // pred_check
          %p136 = pneg %p49
        $region22: #{tpu_custom_call.1} parent=19 // pred_check_branch
          %138 = sbr.rel (%p136) target = $region24
        $region23: #{tpu_custom_call.1} parent=19 // pred_region
          %s139 = sand.u32 %s39, 1
          %s140 = scalar_lea.sflag [#allocation3], %s139
          %s141 = sand.u32 %s39, 1
          %s142 = smul.addr %s141, 4
          %s143 = scalar_lea.vmem [#allocation2], %s142
          %s145 = ssub.s32 64, 64
          %146 = vsyncadd %s140, %s145
          %s147 = sadd.s32 %s23, %s22
          %s148 = smul.addr %s147, 64
          %s149 = scalar_lea.hbm %s0, %s148
          %s151 = sshll.u32 %s143, 4
          %s152 = int_to_ptr.vmem [resolvable:$true] %s151
          %154 = dma.hbm_to_vmem [thread:$0]  %s149, 64, %s152, %s140
        $region24: #{tpu_custom_call.1} parent=19 // pred_fallthru
          _
      $region20: #{tpu_custom_call.1} parent=5 // pred_fallthru
        _
      %p155 = scmp.le.s32.totalorder 1, %s15
      %p156 = scmp.lt.s32.totalorder %s15, 3
      %p157 = pnand %p155, %p156
      %p158 = pneg %p157
      // Predicated region
      $region25: #{tpu_custom_call.1} parent=5 // pred_check
        _
      $region26: #{tpu_custom_call.1} parent=5 // pred_check_branch
        %160 = sbr.rel (%p157) target = $region28
      $region27: #{tpu_custom_call.1} parent=5 // pred_region
        %s161 = ssub.s32 %s15, 1
        %s162 = sand.u32 %s42, 1
        %s163 = scalar_lea.sflag [#allocation3], %s162
        %s164 = sand.u32 %s42, 1
        %s165 = smul.addr %s164, 4
        %s166 = scalar_lea.vmem [#allocation2], %s165
        // Predicated region
        $region29: #{tpu_custom_call.1} parent=27 // pred_check
          %p167 = pneg %p55
        $region30: #{tpu_custom_call.1} parent=27 // pred_check_branch
          %169 = sbr.rel (%p167) target = $region32
        $region31: #{tpu_custom_call.1} parent=27 // pred_region
          %170 = dma.done %s163, 64
        $region32: #{tpu_custom_call.1} parent=27 // pred_fallthru
          _
        // Predicated region
        $region33: #{tpu_custom_call.1} parent=27 // pred_check
          %p171 = pneg %p76
        $region34: #{tpu_custom_call.1} parent=27 // pred_check_branch
          %173 = sbr.rel (%p171) target = $region36
        $region35: #{tpu_custom_call.1} parent=27 // pred_region
          %174 = dma.done [#allocation6], 768
        $region36: #{tpu_custom_call.1} parent=27 // pred_fallthru
          _
        %s175 = sand.u32 %s42, 1
        %s176 = scalar_lea.sflag [#allocation3], %s175
        %s177 = sand.u32 %s42, 1
        %s178 = smul.addr %s177, 4
        %s179 = scalar_lea.vmem [#allocation2], %s178
        %p180 = pneg %p55
        %p181 = pneg %p52
        %p182 = pneg %p76
        %p183 = pneg %p73
        %p184 = pneg %p104
        %p185 = pneg %p101
        %s186 = sand.u32 %s91, 1
        %s187 = scalar_lea.sflag [#allocation4], %s186
        %s188 = sand.u32 %s91, 1
        %s189 = smul.addr %s188, 12
        %s190 = scalar_lea.vmem [#allocation7], %s189
        %v192 = vld [vmem:[%s166] sm:$0xf]
        %v193 = vld [vmem:[#allocation5] sm:$0xff]
        %v194 = vld [vmem:[#allocation5 + $0x8] sm:$0xf]
        %v195 = vld [vmem:[#allocation5 + $0xc] sm:$0xff]
        %v196 = vld [vmem:[#allocation5 + $0x14] sm:$0xf]
        %v197 = vld [vmem:[#allocation5 + $0x18] sm:$0xff]
        %v198 = vld [vmem:[#allocation5 + $0x20] sm:$0xf]
        %v199 = vld [vmem:[#allocation5 + $0x24] sm:$0xff]
        %v200 = vld [vmem:[#allocation5 + $0x2c] sm:$0xf]
        %v209 = vunpack.c.l.b16 %v193
        %v210 = vunpack.c.h.b16 %v193
        %v211 = vunpack.c.l.b16 %v194
        %v212 = vunpack.c.l.b16 %v195
        %v213 = vunpack.c.h.b16 %v195
        %v214 = vunpack.c.l.b16 %v196
        %v215 = vunpack.c.l.b16 %v197
        %v216 = vunpack.c.h.b16 %v197
        %v217 = vunpack.c.l.b16 %v198
        %v218 = vunpack.c.l.b16 %v199
        %v219 = vunpack.c.h.b16 %v199
        %v220 = vunpack.c.l.b16 %v200
        %v221 = vpack.c.b16 %v212, %v209
        %v222 = vpack.c.b16 %v213, %v210
        %v223 = vpack.c.b16 %v214, %v211
        %v224 = vpack.c.b16 %v218, %v215
        %v225 = vpack.c.b16 %v219, %v216
        %v226 = vpack.c.b16 %v220, %v217
        %vm233 = vcmask 261120
        %v235 = vsel %vm233, %v192, 0
        %237 = vmatprep.subr.bf16.mxu0 %v222
        %238 = vmatpush1.bf16.msra.mxu0 %v221
        %239 = vmatprep.subr.bf16.mxu0 %v225
        %240 = vmatpush1.bf16.msra.mxu0 %v224
        %241 = vmatprep.subr.bf16.mxu0 0
        %242 = vmatpush1.bf16.msra.mxu0 0
        %243 = vmatprep.subr.bf16.mxu0 0
        %244 = vmatpush1.bf16.msra.mxu0 0
        %245 = vmatprep.subr.bf16.mxu0 0
        %246 = vmatpush1.bf16.msra.mxu0 0
        %247 = vmatprep.subr.bf16.mxu0 0
        %248 = vmatpush1.bf16.msra.mxu0 0
        %249 = vmatprep.subr.bf16.mxu0 0
        %250 = vmatpush1.bf16.msra.mxu0 0
        %251 = vmatprep.subr.bf16.mxu0 0
        %252 = vmatpush1.bf16.msra.mxu0 0
        %253 = vmatprep.subr.bf16.mxu0 0
        %254 = vmatpush1.bf16.msra.mxu0 0
        %255 = vmatprep.subr.bf16.mxu0 0
        %256 = vmatpush1.bf16.msra.mxu0 0
        %257 = vmatprep.subr.bf16.mxu0 0
        %258 = vmatpush1.bf16.msra.mxu0 0
        %259 = vmatprep.subr.bf16.mxu0 0
        %260 = vmatpush1.bf16.msra.mxu0 0
        %261 = vmatprep.subr.bf16.mxu0 0
        %262 = vmatpush1.bf16.msra.mxu0 0
        %263 = vmatprep.subr.bf16.mxu0 0
        %264 = vmatpush1.bf16.msra.mxu0 0
        %265 = vmatprep.subr.bf16.mxu0 0
        %266 = vmatpush1.bf16.msra.mxu0 0
        %267 = vmatprep.subr.bf16.mxu0 0
        %268 = vmatpush1.bf16.msra.mxu0 0
        %269 = vmatprep.mubr.bf16.mxu0 0
        %270 = vmatmul.mubr.bf16.gmra.mrb[0].mxu0 %v235
        %v271 = vpop.f32.mrb[0].mxu0
        %v272 = vadd.f32 0.0, %v271
        %v273 = vpop.f32.mrb[0].mxu0
        %v274 = vadd.f32 0.0, %v273
        %v275 = vpop.f32.mrb[0].mxu0
        %v276 = vpop.f32.mrb[0].mxu0
        %277 = vdwg.mxu0
        %278 = vmatprep.subr.bf16.mxu0 0
        %279 = vmatpush1.bf16.msra.mxu0 %v223
        %280 = vmatprep.subr.bf16.mxu0 0
        %281 = vmatpush1.bf16.msra.mxu0 %v226
        %282 = vmatprep.subr.bf16.mxu0 0
        %283 = vmatpush1.bf16.msra.mxu0 0
        %284 = vmatprep.subr.bf16.mxu0 0
        %285 = vmatpush1.bf16.msra.mxu0 0
        %286 = vmatprep.subr.bf16.mxu0 0
        %287 = vmatpush1.bf16.msra.mxu0 0
        %288 = vmatprep.subr.bf16.mxu0 0
        %289 = vmatpush1.bf16.msra.mxu0 0
        %290 = vmatprep.subr.bf16.mxu0 0
        %291 = vmatpush1.bf16.msra.mxu0 0
        %292 = vmatprep.subr.bf16.mxu0 0
        %293 = vmatpush1.bf16.msra.mxu0 0
        %294 = vmatprep.subr.bf16.mxu0 0
        %295 = vmatpush1.bf16.msra.mxu0 0
        %296 = vmatprep.subr.bf16.mxu0 0
        %297 = vmatpush1.bf16.msra.mxu0 0
        %298 = vmatprep.subr.bf16.mxu0 0
        %299 = vmatpush1.bf16.msra.mxu0 0
        %300 = vmatprep.subr.bf16.mxu0 0
        %301 = vmatpush1.bf16.msra.mxu0 0
        %302 = vmatprep.subr.bf16.mxu0 0
        %303 = vmatpush1.bf16.msra.mxu0 0
        %304 = vmatprep.subr.bf16.mxu0 0
        %305 = vmatpush1.bf16.msra.mxu0 0
        %306 = vmatprep.subr.bf16.mxu0 0
        %307 = vmatpush1.bf16.msra.mxu0 0
        %308 = vmatprep.subr.bf16.mxu0 0
        %309 = vmatpush1.bf16.msra.mxu0 0
        %310 = vmatprep.mubr.bf16.mxu0 0
        %311 = vmatmul.mubr.bf16.gmra.mrb[0].mxu0 %v235
        %v312 = vpop.f32.mrb[0].mxu0
        %v313 = vadd.f32 0.0, %v312
        %v314 = vpop.f32.mrb[0].mxu0
        %v315 = vpop.f32.mrb[0].mxu0
        %v316 = vpop.f32.mrb[0].mxu0
        %317 = vdwg.mxu0
        %v318 = vpack.c.bf16 %v272, %v272
        %v319 = vpack.c.bf16 %v274, %v274
        %v320 = vpack.c.bf16 %v313, %v313
        %v324 = vunpack.c.l.b16 %v318
        %v325 = vunpack.c.l.b16 %v319
        %v326 = vunpack.c.l.b16 %v320
        %v327 = vpack.c.b16 %v325, %v324
        %v328 = vpack.c.b16 %v326, %v326
        %331 = vst [vmem:[%s190] sm:$0xff] %v327
        %332 = vst [vmem:[%s190 + $0x8] sm:$0xf] %v328
        %s333 = sand.u32 %s91, 1
        %s334 = scalar_lea.sflag [#allocation4], %s333
        %s335 = sand.u32 %s91, 1
        %s336 = smul.addr %s335, 12
        %s337 = scalar_lea.vmem [#allocation7], %s336
        // Predicated region
        $region37: #{tpu_custom_call.1} parent=27 // pred_check
          %p338 = pneg %p101
        $region38: #{tpu_custom_call.1} parent=27 // pred_check_branch
          %340 = sbr.rel (%p338) target = $region40
        $region39: #{tpu_custom_call.1} parent=27 // pred_region
          %s342 = ssub.s32 192, 192
          %343 = vsyncadd %s334, %s342
          %s344 = smul.addr %s25, 3
          %s345 = smul.addr %s24, 3
          %s346 = sadd.s32 %s344, %s345
          %s347 = smul.addr %s346, 64
          %s348 = scalar_lea.hbm %s2, %s347
          %s350 = sshll.u32 %s337, 4
          %s351 = int_to_ptr.vmem [resolvable:$true] %s350
          %353 = dma.vmem_to_hbm [thread:$0]  %s351, 192, %s348, %s334
        $region40: #{tpu_custom_call.1} parent=27 // pred_fallthru
          _
      $region28: #{tpu_custom_call.1} parent=5 // pred_fallthru
        _
      %p354 = scmp.le.s32.totalorder 2, %s15
      // Predicated region
      $region41: #{tpu_custom_call.1} parent=5 // pred_check
        %p355 = pneg %p354
      $region42: #{tpu_custom_call.1} parent=5 // pred_check_branch
        %357 = sbr.rel (%p355) target = $region44
      $region43: #{tpu_custom_call.1} parent=5 // pred_region
        %s358 = ssub.s32 %s15, 2
        // Predicated region
        $region45: #{tpu_custom_call.1} parent=43 // pred_check
          %p359 = pneg %p107
        $region46: #{tpu_custom_call.1} parent=43 // pred_check_branch
          %361 = sbr.rel (%p359) target = $region48
        $region47: #{tpu_custom_call.1} parent=43 // pred_region
          %s362 = sand.u32 %s92, 1
          %s363 = scalar_lea.sflag [#allocation4], %s362
          %s364 = sand.u32 %s92, 1
          %s365 = smul.addr %s364, 12
          %s366 = scalar_lea.vmem [#allocation7], %s365
          %367 = dma.done %s363, 192
        $region48: #{tpu_custom_call.1} parent=43 // pred_fallthru
          _
      $region44: #{tpu_custom_call.1} parent=5 // pred_fallthru
        _
    $region6: #{tpu_custom_call.1} parent=1 // loop_footer
      %s19 = sadd.s32 1, %s15
    $region7: #{tpu_custom_call.1} parent=1 // loop_footer_branch
      %14 = sbr.rel target = $region3
    $region8: #{tpu_custom_call.1} parent=1 // loop_exit
      _
    %368 = vsyncpa [#allocation3], 1
    %s369 = scalar_lea.sflag [#allocation3], 1
    %370 = vsyncpa %s369, 1
    %371 = vsyncpa [#allocation6], 1
    %372 = vsyncpa [#allocation4], 1
    %s373 = scalar_lea.sflag [#allocation4], 1
    %374 = vsyncpa %s373, 1

</llo_original>
